<compile_context>
chip_gen: v7x
topology: tpu7x:2x2x1
jax: 0.10.0
libtpu: 0.0.40
codegen_flags: <defaults>
</compile_context>

<pallas_src>
import functools

import jax
import jax.numpy as jnp
from jax import lax
from jax.experimental import pallas as pl
from jax.experimental.pallas import tpu as pltpu


# ------------------------------- fused kernel -------------------------------


def _metric_head_kernel(x_ref, sid_ref, w1_ref, b1_ref, w2_ref, b2_ref,
                        feats_ref, logits_ref, *,
                        num_slots, pad_cols, inv_temperature):
    """proj MLP + L2 normalize + n-pair logits for one batch tile.

    x_ref      : [2, rows, slot_size]   (view0 = img slots, view1 = img2 slots)
    sid_ref    : [rows, 1] int32        slot index (row % num_slots) of each anchor row
    feats_ref  : [2, rows, dim]         normalized projected slots, both views
    logits_ref : [rows, n_pad]          lane-dense padded logits (cols >= 1+2*(S-1) are 0)
    """
    S = num_slots
    rows = x_ref.shape[1]

    # ---- projection MLP: both views in one matmul per layer (bf16 MXU, f32 accum) ----
    x = jnp.concatenate([x_ref[0], x_ref[1]], axis=0)               # [2*rows, slot_size]
    h = jnp.dot(x, w1_ref[...], preferred_element_type=jnp.float32)
    h = jnp.maximum(h + b1_ref[...].astype(jnp.float32), 0.0)       # Linear + ReLU
    f = jnp.dot(h.astype(w2_ref.dtype), w2_ref[...],
                preferred_element_type=jnp.float32)
    f = f + b2_ref[...].astype(jnp.float32)                         # final Linear
    # F.normalize(dim=-1): x / max(||x||, 1e-12) == x * rsqrt(max(||x||^2, 1e-24))
    sumsq = jnp.sum(f * f, axis=-1, keepdims=True)
    f = f * lax.rsqrt(jnp.maximum(sumsq, 1e-24))

    f0 = f[:rows]                                  # anchors / view-0 keys   [rows, dim]
    f1 = f[rows:]                                  # positives / view-1 keys [rows, dim]
    feats_ref[0] = f0
    feats_ref[1] = f1

    # ---- n-pair logits (work independent of batch_tile; static loops over S only) ----
    def row_shift(a, delta):
        # result[r] = a[(r + delta) mod rows]; wrapped rows are never selected below.
        d = delta % rows
        if d == 0:
            return a
        return jnp.concatenate([a[d:], a[:d]], axis=0)

    pos = jnp.sum(f0 * f1, axis=-1, keepdims=True)                  # [rows, 1]

    # products of anchor row r with rows r+delta of each view (same batch block only
    # is ever selected, since |delta| <= S-1 and blocks are S rows).
    p0, p1 = {}, {}
    for delta in range(-(S - 1), S):
        if delta == 0:
            continue
        p0[delta] = jnp.sum(f0 * row_shift(f0, delta), axis=-1, keepdims=True)
        p1[delta] = jnp.sum(f0 * row_shift(f1, delta), axis=-1, keepdims=True)

    s_idx = sid_ref[...]                                            # [rows, 1] int32

    def neg_col(p, m):
        # negatives keep original slot order with slot s removed:
        # column m uses slot j = m (if m < s) else m + 1  ->  delta = j - s.
        col = jnp.zeros((rows, 1), jnp.float32)
        for s in range(S):
            j = m if m < s else m + 1
            col = jnp.where(s_idx == s, p[j - s], col)
        return col

    parts = [pos]
    parts += [neg_col(p0, m) for m in range(S - 1)]                 # view-0 negatives
    parts += [neg_col(p1, m) for m in range(S - 1)]                 # view-1 negatives
    if pad_cols:
        parts.append(jnp.zeros((rows, pad_cols), jnp.float32))
    # single lane-dense (multiple-of-128-wide) store
    logits_ref[...] = jnp.concatenate(parts, axis=1) * inv_temperature


# -------------------------------- JAX wrapper --------------------------------


def _choose_batch_tile(B, S, max_rows):
    best = 0
    for d in range(1, B + 1):
        if B % d == 0 and (d * S) % 8 == 0 and d * S <= max_rows:
            best = d
    return best


def metric_head_forward(slots, w1, b1, w2, b2, *, num_slots, dim, temperature,
                        batch_tile=None, max_rows=512):
    """proj head + normalize + n-pair logits (MetricSlotAttentionModel.forward head).

    slots: [2B, num_slots, slot_size]  (first B rows = img view, last B = img2 view)
    Returns (feats, logits, labels):
      feats : [2B, num_slots, dim]                 normalized projected slots
      logits: [B*num_slots, 1 + 2*(num_slots-1)]
      labels: [B*num_slots] int32 zeros            # TODO(synk): torch uses int64
    """
    two_b, S, slot_size = slots.shape
    assert S == num_slots and S >= 1
    B = two_b // 2
    assert 2 * B == two_b
    hidden = w1.shape[1]
    assert w1.shape == (slot_size, hidden)
    assert w2.shape == (hidden, dim)
    assert b1.shape == (hidden,) and b2.shape == (dim,)

    n_logit = 1 + 2 * (S - 1)
    n_pad = pl.cdiv(n_logit, 128) * 128            # lane-dense logits width
    max_rows = max(max_rows, 8 * S)

    # choose batch tile: rows = batch_tile*S must be a multiple of 8, as large as
    # fits the per-step budget; pad the batch if no valid divisor exists.
    B_pad = B
    if batch_tile is None:
        batch_tile = _choose_batch_tile(B, S, max_rows)
        if batch_tile == 0:
            B_pad = ((B + 7) // 8) * 8             # 8 | B_pad  =>  valid tile exists
            batch_tile = _choose_batch_tile(B_pad, S, max_rows)
    assert batch_tile > 0 and B_pad % batch_tile == 0 and (batch_tile * S) % 8 == 0
    rows = batch_tile * S
    num_blocks = B_pad // batch_tile

    # [2B, S, C] -> [2, B_pad*S, C]  (view-major; zero-pad extra batch elements)
    x = slots.reshape(2, B, S, slot_size)
    if B_pad != B:
        x = jnp.pad(x, ((0, 0), (0, B_pad - B), (0, 0), (0, 0)))
    x = x.reshape(2, B_pad * S, slot_size)

    slot_ids = jnp.tile(jnp.arange(S, dtype=jnp.int32), B_pad).reshape(B_pad * S, 1)
    b1_2d = b1.reshape(1, hidden)
    b2_2d = b2.reshape(1, dim)

    kernel = functools.partial(
        _metric_head_kernel, num_slots=S, pad_cols=n_pad - n_logit,
        inv_temperature=1.0 / float(temperature))

    const = lambda i: (0, 0)                       # weights/biases resident in VMEM
    feats2, logits_pad = pl.pallas_call(
        kernel,
        out_shape=(
            jax.ShapeDtypeStruct((2, B_pad * S, dim), jnp.float32),
            jax.ShapeDtypeStruct((B_pad * S, n_pad), jnp.float32),
        ),
        grid=(num_blocks,),
        in_specs=[
            pl.BlockSpec((2, rows, slot_size), lambda i: (0, i, 0)),   # both views, one block
            pl.BlockSpec((rows, 1), lambda i: (i, 0)),                 # slot ids
            pl.BlockSpec((slot_size, hidden), const),                  # w1
            pl.BlockSpec((1, hidden), const),                          # b1
            pl.BlockSpec((hidden, dim), const),                        # w2
            pl.BlockSpec((1, dim), const),                             # b2
        ],
        out_specs=(
            pl.BlockSpec((2, rows, dim), lambda i: (0, i, 0)),         # feats
            pl.BlockSpec((rows, n_pad), lambda i: (i, 0)),             # padded logits
        ),
        compiler_params=pltpu.CompilerParams(
            dimension_semantics=("parallel",),     # no cross-step carry; v7x 2-TC split
            vmem_limit_bytes=32 * 1024 * 1024),
    )(x, slot_ids, w1, b1_2d, w2, b2_2d)

    feats = feats2.reshape(2, B_pad, S, dim)[:, :B].reshape(2 * B, S, dim)
    logits = logits_pad[:B * S, :n_logit]
    labels = jnp.zeros((B * S,), dtype=jnp.int32)
    return feats, logits, labels


# ------------------------------ pure-JAX reference ---------------------------


def reference_forward(slots, w1, b1, w2, b2, *, num_slots, dim, temperature):
    two_b, S, slot_size = slots.shape
    B = two_b // 2
    x = slots.astype(jnp.float32).reshape(-1, slot_size)
    w1f, b1f = w1.astype(jnp.float32), b1.astype(jnp.float32)
    w2f, b2f = w2.astype(jnp.float32), b2.astype(jnp.float32)
    h = jnp.maximum(x @ w1f + b1f, 0.0)
    feat = h @ w2f + b2f
    feat = feat / jnp.maximum(jnp.linalg.norm(feat, axis=-1, keepdims=True), 1e-12)
    feats = feat.reshape(2, B, S, dim)
    anchors = feats[0].reshape(-1, dim)
    positives = feats[1].reshape(-1, dim)
    negs = []
    for s in range(S):
        cat = jnp.concatenate([feats[:, :, :s], feats[:, :, s + 1:]], axis=2)   # [2,B,S-1,D]
        negs.append(jnp.transpose(cat, (1, 0, 2, 3)).reshape(B, 2 * (S - 1), dim))
    negatives = jnp.stack(negs, axis=1).reshape(B * S, 2 * (S - 1), dim)
    l_pos = jnp.einsum("nc,nc->n", anchors, positives)[:, None]
    l_neg = jnp.einsum("nc,nmc->nm", anchors, negatives)
    logits = jnp.concatenate([l_pos, l_neg], axis=1) / temperature
    return feat.reshape(two_b, S, dim), logits


# ----------------------------------- main ------------------------------------


if __name__ == "__main__":
    # Small, module-consistent shapes.
    B = 2            # per-view batch size (img and img2 each [B, C, H, W])
    num_slots = 4
    slot_size = 32   # model.slot_size
    dim = 32         # contrastive feature dim (mlp[-1] == dim)
    hidden = 64      # mlp = [64, 32] -> Linear(32,64)+ReLU, Linear(64,32)
    T = 0.5

    key = jax.random.PRNGKey(0)
    k_slots, k_w1, k_b1, k_w2, k_b2 = jax.random.split(key, 5)

    # Stand-in for the base model output `slots` on the concatenated (img, img2) batch.
    # bf16 HBM operands (halved DMA bytes, native MXU path); accumulation stays f32.
    slots = jax.random.normal(k_slots, (2 * B, num_slots, slot_size), dtype=jnp.bfloat16)
    w1 = 0.05 * jax.random.normal(k_w1, (slot_size, hidden), dtype=jnp.bfloat16)
    b1 = 0.01 * jax.random.normal(k_b1, (hidden,), dtype=jnp.float32)
    w2 = 0.05 * jax.random.normal(k_w2, (hidden, dim), dtype=jnp.bfloat16)
    b2 = 0.01 * jax.random.normal(k_b2, (dim,), dtype=jnp.float32)

    feats, logits, labels = metric_head_forward(
        slots, w1, b1, w2, b2, num_slots=num_slots, dim=dim, temperature=T)
    jax.block_until_ready((feats, logits, labels))

    ref_feats, ref_logits = reference_forward(
        slots, w1, b1, w2, b2, num_slots=num_slots, dim=dim, temperature=T)

    assert feats.shape == (2 * B, num_slots, dim)
    assert logits.shape == (B * num_slots, 1 + 2 * (num_slots - 1))
    assert labels.shape == (B * num_slots,)
    # bf16 inputs + bf16 hidden activation => ~1e-3-level differences vs f32 reference.
    assert jnp.allclose(feats, ref_feats, atol=2e-2, rtol=2e-2), "feats mismatch vs reference"
    assert jnp.allclose(logits, ref_logits, atol=2e-2, rtol=2e-2), "logits mismatch vs reference"

    print("KERNEL_OK")
</pallas_src>

<mosaic_0001>
module attributes {stable_mosaic.version = 11 : i64} {
  func.func @_metric_head_kernel(%arg0: i32, %arg1: memref<2x8x32xbf16, #tpu.memory_space<vmem>>, %arg2: memref<8x1xi32, #tpu.memory_space<vmem>>, %arg3: memref<32x64xbf16, #tpu.memory_space<vmem>>, %arg4: memref<1x64xf32, #tpu.memory_space<vmem>>, %arg5: memref<64x32xbf16, #tpu.memory_space<vmem>>, %arg6: memref<1x32xf32, #tpu.memory_space<vmem>>, %arg7: memref<2x8x32xf32, #tpu.memory_space<vmem>>, %arg8: memref<8x128xf32, #tpu.memory_space<vmem>>) attributes {dimension_semantics = [#tpu.dimension_semantics<parallel>], iteration_bounds = array<i64: 1>, scalar_prefetch = 0 : i64, scratch_operands = 0 : i64, tpu.core_type = #tpu.core_type<tc>, window_params = [{transform_indices = @transform_0, window_bounds = array<i64: 2, 8, 32>}, {transform_indices = @transform_1, window_bounds = array<i64: 8, 1>}, {pipeline_mode = #tpu.pipeline_mode<synchronous>, transform_indices = @transform_2, window_bounds = array<i64: 32, 64>}, {pipeline_mode = #tpu.pipeline_mode<synchronous>, transform_indices = @transform_3, window_bounds = array<i64: 1, 64>}, {pipeline_mode = #tpu.pipeline_mode<synchronous>, transform_indices = @transform_4, window_bounds = array<i64: 64, 32>}, {pipeline_mode = #tpu.pipeline_mode<synchronous>, transform_indices = @transform_5, window_bounds = array<i64: 1, 32>}, {transform_indices = @transform_6, window_bounds = array<i64: 2, 8, 32>}, {transform_indices = @transform_7, window_bounds = array<i64: 8, 128>}]} {
    %c0 = arith.constant 0 : index
    %c0_0 = arith.constant 0 : index
    %c0_1 = arith.constant 0 : index
    %0 = vector.load %arg1[%c0, %c0_0, %c0_1] : memref<2x8x32xbf16, #tpu.memory_space<vmem>>, vector<1x8x32xbf16>
    %1 = vector.shape_cast %0 : vector<1x8x32xbf16> to vector<8x32xbf16>
    %c1 = arith.constant 1 : index
    %c0_2 = arith.constant 0 : index
    %c0_3 = arith.constant 0 : index
    %2 = vector.load %arg1[%c1, %c0_2, %c0_3] : memref<2x8x32xbf16, #tpu.memory_space<vmem>>, vector<1x8x32xbf16>
    %3 = vector.shape_cast %2 : vector<1x8x32xbf16> to vector<8x32xbf16>
    %4 = tpu.concatenate %1, %3 in 0 : vector<8x32xbf16>, vector<8x32xbf16> -> vector<16x32xbf16>
    %c0_4 = arith.constant 0 : index
    %c0_5 = arith.constant 0 : index
    %5 = vector.load %arg3[%c0_4, %c0_5] : memref<32x64xbf16, #tpu.memory_space<vmem>>, vector<32x64xbf16>
    %cst = arith.constant dense<0.000000e+00> : vector<16x64xf32>
    %6 = tpu.matmul %4, %5, %cst {dimension_numbers = #tpu.dot_dimension_numbers<[1], [0], [0], [1], [0, 0, 1, 1], [], []>} : vector<16x32xbf16>, vector<32x64xbf16>, vector<16x64xf32> -> vector<16x64xf32>
    %c0_6 = arith.constant 0 : index
    %c0_7 = arith.constant 0 : index
    %7 = vector.load %arg4[%c0_6, %c0_7] : memref<1x64xf32, #tpu.memory_space<vmem>>, vector<1x64xf32>
    %8 = vector.broadcast %7 : vector<1x64xf32> to vector<16x64xf32>
    %9 = arith.addf %6, %8 : vector<16x64xf32>
    %cst_8 = arith.constant 0.000000e+00 : f32
    %10 = vector.broadcast %cst_8 : f32 to vector<16x64xf32>
    %11 = arith.maximumf %9, %10 : vector<16x64xf32>
    %12 = arith.truncf %11 : vector<16x64xf32> to vector<16x64xbf16>
    %c0_9 = arith.constant 0 : index
    %c0_10 = arith.constant 0 : index
    %13 = vector.load %arg5[%c0_9, %c0_10] : memref<64x32xbf16, #tpu.memory_space<vmem>>, vector<64x32xbf16>
    %cst_11 = arith.constant dense<0.000000e+00> : vector<16x32xf32>
    %14 = tpu.matmul %12, %13, %cst_11 {dimension_numbers = #tpu.dot_dimension_numbers<[1], [0], [0], [1], [0, 0, 1, 1], [], []>} : vector<16x64xbf16>, vector<64x32xbf16>, vector<16x32xf32> -> vector<16x32xf32>
    %c0_12 = arith.constant 0 : index
    %c0_13 = arith.constant 0 : index
    %15 = vector.load %arg6[%c0_12, %c0_13] : memref<1x32xf32, #tpu.memory_space<vmem>>, vector<1x32xf32>
    %16 = vector.broadcast %15 : vector<1x32xf32> to vector<16x32xf32>
    %17 = arith.addf %14, %16 : vector<16x32xf32>
    %18 = arith.mulf %17, %17 : vector<16x32xf32>
    %cst_14 = arith.constant dense<0.000000e+00> : vector<16xf32>
    %19 = vector.multi_reduction <add>, %18, %cst_14 [1] : vector<16x32xf32> to vector<16xf32>
    %20 = vector.shape_cast %19 : vector<16xf32> to vector<16x1xf32>
    %cst_15 = arith.constant 1.000000e-24 : f32
    %21 = vector.broadcast %cst_15 : f32 to vector<16x1xf32>
    %22 = arith.maximumf %20, %21 : vector<16x1xf32>
    %23 = math.rsqrt %22 : vector<16x1xf32>
    %24 = vector.broadcast %23 : vector<16x1xf32> to vector<16x32xf32>
    %25 = arith.mulf %17, %24 : vector<16x32xf32>
    %26 = vector.extract_strided_slice %25 {offsets = [0, 0], sizes = [8, 32], strides = [1, 1]} : vector<16x32xf32> to vector<8x32xf32>
    %27 = vector.extract_strided_slice %25 {offsets = [8, 0], sizes = [8, 32], strides = [1, 1]} : vector<16x32xf32> to vector<8x32xf32>
    %c0_16 = arith.constant 0 : index
    %c0_17 = arith.constant 0 : index
    %c0_18 = arith.constant 0 : index
    %28 = vector.load %arg7[%c0_16, %c0_17, %c0_18] : memref<2x8x32xf32, #tpu.memory_space<vmem>>, vector<1x8x32xf32>
    %29 = vector.shape_cast %28 : vector<1x8x32xf32> to vector<8x32xf32>
    %30 = vector.shape_cast %26 : vector<8x32xf32> to vector<1x8x32xf32>
    tpu.vector_store %arg7[%c0_16, %c0_17, %c0_18], %30 {strides = array<i32>} : memref<2x8x32xf32, #tpu.memory_space<vmem>>, vector<1x8x32xf32>,
    %c1_19 = arith.constant 1 : index
    %c0_20 = arith.constant 0 : index
    %c0_21 = arith.constant 0 : index
    %31 = vector.load %arg7[%c1_19, %c0_20, %c0_21] : memref<2x8x32xf32, #tpu.memory_space<vmem>>, vector<1x8x32xf32>
    %32 = vector.shape_cast %31 : vector<1x8x32xf32> to vector<8x32xf32>
    %33 = vector.shape_cast %27 : vector<8x32xf32> to vector<1x8x32xf32>
    tpu.vector_store %arg7[%c1_19, %c0_20, %c0_21], %33 {strides = array<i32>} : memref<2x8x32xf32, #tpu.memory_space<vmem>>, vector<1x8x32xf32>,
    %34 = arith.mulf %26, %27 : vector<8x32xf32>
    %cst_22 = arith.constant dense<0.000000e+00> : vector<8xf32>
    %35 = vector.multi_reduction <add>, %34, %cst_22 [1] : vector<8x32xf32> to vector<8xf32>
    %36 = vector.shape_cast %35 : vector<8xf32> to vector<8x1xf32>
    %37 = vector.extract_strided_slice %26 {offsets = [5, 0], sizes = [3, 32], strides = [1, 1]} : vector<8x32xf32> to vector<3x32xf32>
    %38 = vector.extract_strided_slice %26 {offsets = [0, 0], sizes = [5, 32], strides = [1, 1]} : vector<8x32xf32> to vector<5x32xf32>
    %39 = tpu.concatenate %37, %38 in 0 : vector<3x32xf32>, vector<5x32xf32> -> vector<8x32xf32>
    %40 = arith.mulf %26, %39 : vector<8x32xf32>
    %cst_23 = arith.constant dense<0.000000e+00> : vector<8xf32>
    %41 = vector.multi_reduction <add>, %40, %cst_23 [1] : vector<8x32xf32> to vector<8xf32>
    %42 = vector.shape_cast %41 : vector<8xf32> to vector<8x1xf32>
    %43 = vector.extract_strided_slice %27 {offsets = [5, 0], sizes = [3, 32], strides = [1, 1]} : vector<8x32xf32> to vector<3x32xf32>
    %44 = vector.extract_strided_slice %27 {offsets = [0, 0], sizes = [5, 32], strides = [1, 1]} : vector<8x32xf32> to vector<5x32xf32>
    %45 = tpu.concatenate %43, %44 in 0 : vector<3x32xf32>, vector<5x32xf32> -> vector<8x32xf32>
    %46 = arith.mulf %26, %45 : vector<8x32xf32>
    %cst_24 = arith.constant dense<0.000000e+00> : vector<8xf32>
    %47 = vector.multi_reduction <add>, %46, %cst_24 [1] : vector<8x32xf32> to vector<8xf32>
    %48 = vector.shape_cast %47 : vector<8xf32> to vector<8x1xf32>
    %49 = vector.extract_strided_slice %26 {offsets = [6, 0], sizes = [2, 32], strides = [1, 1]} : vector<8x32xf32> to vector<2x32xf32>
    %50 = vector.extract_strided_slice %26 {offsets = [0, 0], sizes = [6, 32], strides = [1, 1]} : vector<8x32xf32> to vector<6x32xf32>
    %51 = tpu.concatenate %49, %50 in 0 : vector<2x32xf32>, vector<6x32xf32> -> vector<8x32xf32>
    %52 = arith.mulf %26, %51 : vector<8x32xf32>
    %cst_25 = arith.constant dense<0.000000e+00> : vector<8xf32>
    %53 = vector.multi_reduction <add>, %52, %cst_25 [1] : vector<8x32xf32> to vector<8xf32>
    %54 = vector.shape_cast %53 : vector<8xf32> to vector<8x1xf32>
    %55 = vector.extract_strided_slice %27 {offsets = [6, 0], sizes = [2, 32], strides = [1, 1]} : vector<8x32xf32> to vector<2x32xf32>
    %56 = vector.extract_strided_slice %27 {offsets = [0, 0], sizes = [6, 32], strides = [1, 1]} : vector<8x32xf32> to vector<6x32xf32>
    %57 = tpu.concatenate %55, %56 in 0 : vector<2x32xf32>, vector<6x32xf32> -> vector<8x32xf32>
    %58 = arith.mulf %26, %57 : vector<8x32xf32>
    %cst_26 = arith.constant dense<0.000000e+00> : vector<8xf32>
    %59 = vector.multi_reduction <add>, %58, %cst_26 [1] : vector<8x32xf32> to vector<8xf32>
    %60 = vector.shape_cast %59 : vector<8xf32> to vector<8x1xf32>
    %61 = vector.extract_strided_slice %26 {offsets = [7, 0], sizes = [1, 32], strides = [1, 1]} : vector<8x32xf32> to vector<1x32xf32>
    %62 = vector.extract_strided_slice %26 {offsets = [0, 0], sizes = [7, 32], strides = [1, 1]} : vector<8x32xf32> to vector<7x32xf32>
    %63 = tpu.concatenate %61, %62 in 0 : vector<1x32xf32>, vector<7x32xf32> -> vector<8x32xf32>
    %64 = arith.mulf %26, %63 : vector<8x32xf32>
    %cst_27 = arith.constant dense<0.000000e+00> : vector<8xf32>
    %65 = vector.multi_reduction <add>, %64, %cst_27 [1] : vector<8x32xf32> to vector<8xf32>
    %66 = vector.shape_cast %65 : vector<8xf32> to vector<8x1xf32>
    %67 = vector.extract_strided_slice %27 {offsets = [7, 0], sizes = [1, 32], strides = [1, 1]} : vector<8x32xf32> to vector<1x32xf32>
    %68 = vector.extract_strided_slice %27 {offsets = [0, 0], sizes = [7, 32], strides = [1, 1]} : vector<8x32xf32> to vector<7x32xf32>
    %69 = tpu.concatenate %67, %68 in 0 : vector<1x32xf32>, vector<7x32xf32> -> vector<8x32xf32>
    %70 = arith.mulf %26, %69 : vector<8x32xf32>
    %cst_28 = arith.constant dense<0.000000e+00> : vector<8xf32>
    %71 = vector.multi_reduction <add>, %70, %cst_28 [1] : vector<8x32xf32> to vector<8xf32>
    %72 = vector.shape_cast %71 : vector<8xf32> to vector<8x1xf32>
    %73 = vector.extract_strided_slice %26 {offsets = [1, 0], sizes = [7, 32], strides = [1, 1]} : vector<8x32xf32> to vector<7x32xf32>
    %74 = vector.extract_strided_slice %26 {offsets = [0, 0], sizes = [1, 32], strides = [1, 1]} : vector<8x32xf32> to vector<1x32xf32>
    %75 = tpu.concatenate %73, %74 in 0 : vector<7x32xf32>, vector<1x32xf32> -> vector<8x32xf32>
    %76 = arith.mulf %26, %75 : vector<8x32xf32>
    %cst_29 = arith.constant dense<0.000000e+00> : vector<8xf32>
    %77 = vector.multi_reduction <add>, %76, %cst_29 [1] : vector<8x32xf32> to vector<8xf32>
    %78 = vector.shape_cast %77 : vector<8xf32> to vector<8x1xf32>
    %79 = vector.extract_strided_slice %27 {offsets = [1, 0], sizes = [7, 32], strides = [1, 1]} : vector<8x32xf32> to vector<7x32xf32>
    %80 = vector.extract_strided_slice %27 {offsets = [0, 0], sizes = [1, 32], strides = [1, 1]} : vector<8x32xf32> to vector<1x32xf32>
    %81 = tpu.concatenate %79, %80 in 0 : vector<7x32xf32>, vector<1x32xf32> -> vector<8x32xf32>
    %82 = arith.mulf %26, %81 : vector<8x32xf32>
    %cst_30 = arith.constant dense<0.000000e+00> : vector<8xf32>
    %83 = vector.multi_reduction <add>, %82, %cst_30 [1] : vector<8x32xf32> to vector<8xf32>
    %84 = vector.shape_cast %83 : vector<8xf32> to vector<8x1xf32>
    %85 = vector.extract_strided_slice %26 {offsets = [2, 0], sizes = [6, 32], strides = [1, 1]} : vector<8x32xf32> to vector<6x32xf32>
    %86 = vector.extract_strided_slice %26 {offsets = [0, 0], sizes = [2, 32], strides = [1, 1]} : vector<8x32xf32> to vector<2x32xf32>
    %87 = tpu.concatenate %85, %86 in 0 : vector<6x32xf32>, vector<2x32xf32> -> vector<8x32xf32>
    %88 = arith.mulf %26, %87 : vector<8x32xf32>
    %cst_31 = arith.constant dense<0.000000e+00> : vector<8xf32>
    %89 = vector.multi_reduction <add>, %88, %cst_31 [1] : vector<8x32xf32> to vector<8xf32>
    %90 = vector.shape_cast %89 : vector<8xf32> to vector<8x1xf32>
    %91 = vector.extract_strided_slice %27 {offsets = [2, 0], sizes = [6, 32], strides = [1, 1]} : vector<8x32xf32> to vector<6x32xf32>
    %92 = vector.extract_strided_slice %27 {offsets = [0, 0], sizes = [2, 32], strides = [1, 1]} : vector<8x32xf32> to vector<2x32xf32>
    %93 = tpu.concatenate %91, %92 in 0 : vector<6x32xf32>, vector<2x32xf32> -> vector<8x32xf32>
    %94 = arith.mulf %26, %93 : vector<8x32xf32>
    %cst_32 = arith.constant dense<0.000000e+00> : vector<8xf32>
    %95 = vector.multi_reduction <add>, %94, %cst_32 [1] : vector<8x32xf32> to vector<8xf32>
    %96 = vector.shape_cast %95 : vector<8xf32> to vector<8x1xf32>
    %97 = vector.extract_strided_slice %26 {offsets = [3, 0], sizes = [5, 32], strides = [1, 1]} : vector<8x32xf32> to vector<5x32xf32>
    %98 = vector.extract_strided_slice %26 {offsets = [0, 0], sizes = [3, 32], strides = [1, 1]} : vector<8x32xf32> to vector<3x32xf32>
    %99 = tpu.concatenate %97, %98 in 0 : vector<5x32xf32>, vector<3x32xf32> -> vector<8x32xf32>
    %100 = arith.mulf %26, %99 : vector<8x32xf32>
    %cst_33 = arith.constant dense<0.000000e+00> : vector<8xf32>
    %101 = vector.multi_reduction <add>, %100, %cst_33 [1] : vector<8x32xf32> to vector<8xf32>
    %102 = vector.shape_cast %101 : vector<8xf32> to vector<8x1xf32>
    %103 = vector.extract_strided_slice %27 {offsets = [3, 0], sizes = [5, 32], strides = [1, 1]} : vector<8x32xf32> to vector<5x32xf32>
    %104 = vector.extract_strided_slice %27 {offsets = [0, 0], sizes = [3, 32], strides = [1, 1]} : vector<8x32xf32> to vector<3x32xf32>
    %105 = tpu.concatenate %103, %104 in 0 : vector<5x32xf32>, vector<3x32xf32> -> vector<8x32xf32>
    %106 = arith.mulf %26, %105 : vector<8x32xf32>
    %cst_34 = arith.constant dense<0.000000e+00> : vector<8xf32>
    %107 = vector.multi_reduction <add>, %106, %cst_34 [1] : vector<8x32xf32> to vector<8xf32>
    %108 = vector.shape_cast %107 : vector<8xf32> to vector<8x1xf32>
    %c0_35 = arith.constant 0 : index
    %c0_36 = arith.constant 0 : index
    %109 = vector.load %arg2[%c0_35, %c0_36] : memref<8x1xi32, #tpu.memory_space<vmem>>, vector<8x1xi32>
    %cst_37 = arith.constant 0.000000e+00 : f32
    %110 = vector.broadcast %cst_37 : f32 to vector<8x1xf32>
    %c0_i32 = arith.constant 0 : i32
    %111 = vector.broadcast %c0_i32 : i32 to vector<8x1xi32>
    %112 = arith.cmpi eq, %109, %111 : vector<8x1xi32>
    %113 = arith.select %112, %78, %110 : vector<8x1xi1>, vector<8x1xf32>
    %c1_i32 = arith.constant 1 : i32
    %114 = vector.broadcast %c1_i32 : i32 to vector<8x1xi32>
    %115 = arith.cmpi eq, %109, %114 : vector<8x1xi32>
    %116 = arith.select %115, %66, %113 : vector<8x1xi1>, vector<8x1xf32>
    %c2_i32 = arith.constant 2 : i32
    %117 = vector.broadcast %c2_i32 : i32 to vector<8x1xi32>
    %118 = arith.cmpi eq, %109, %117 : vector<8x1xi32>
    %119 = arith.select %118, %54, %116 : vector<8x1xi1>, vector<8x1xf32>
    %c3_i32 = arith.constant 3 : i32
    %120 = vector.broadcast %c3_i32 : i32 to vector<8x1xi32>
    %121 = arith.cmpi eq, %109, %120 : vector<8x1xi32>
    %122 = arith.select %121, %42, %119 : vector<8x1xi1>, vector<8x1xf32>
    %cst_38 = arith.constant 0.000000e+00 : f32
    %123 = vector.broadcast %cst_38 : f32 to vector<8x1xf32>
    %c0_i32_39 = arith.constant 0 : i32
    %124 = vector.broadcast %c0_i32_39 : i32 to vector<8x1xi32>
    %125 = arith.cmpi eq, %109, %124 : vector<8x1xi32>
    %126 = arith.select %125, %90, %123 : vector<8x1xi1>, vector<8x1xf32>
    %c1_i32_40 = arith.constant 1 : i32
    %127 = vector.broadcast %c1_i32_40 : i32 to vector<8x1xi32>
    %128 = arith.cmpi eq, %109, %127 : vector<8x1xi32>
    %129 = arith.select %128, %78, %126 : vector<8x1xi1>, vector<8x1xf32>
    %c2_i32_41 = arith.constant 2 : i32
    %130 = vector.broadcast %c2_i32_41 : i32 to vector<8x1xi32>
    %131 = arith.cmpi eq, %109, %130 : vector<8x1xi32>
    %132 = arith.select %131, %66, %129 : vector<8x1xi1>, vector<8x1xf32>
    %c3_i32_42 = arith.constant 3 : i32
    %133 = vector.broadcast %c3_i32_42 : i32 to vector<8x1xi32>
    %134 = arith.cmpi eq, %109, %133 : vector<8x1xi32>
    %135 = arith.select %134, %54, %132 : vector<8x1xi1>, vector<8x1xf32>
    %cst_43 = arith.constant 0.000000e+00 : f32
    %136 = vector.broadcast %cst_43 : f32 to vector<8x1xf32>
    %c0_i32_44 = arith.constant 0 : i32
    %137 = vector.broadcast %c0_i32_44 : i32 to vector<8x1xi32>
    %138 = arith.cmpi eq, %109, %137 : vector<8x1xi32>
    %139 = arith.select %138, %102, %136 : vector<8x1xi1>, vector<8x1xf32>
    %c1_i32_45 = arith.constant 1 : i32
    %140 = vector.broadcast %c1_i32_45 : i32 to vector<8x1xi32>
    %141 = arith.cmpi eq, %109, %140 : vector<8x1xi32>
    %142 = arith.select %141, %90, %139 : vector<8x1xi1>, vector<8x1xf32>
    %c2_i32_46 = arith.constant 2 : i32
    %143 = vector.broadcast %c2_i32_46 : i32 to vector<8x1xi32>
    %144 = arith.cmpi eq, %109, %143 : vector<8x1xi32>
    %145 = arith.select %144, %78, %142 : vector<8x1xi1>, vector<8x1xf32>
    %c3_i32_47 = arith.constant 3 : i32
    %146 = vector.broadcast %c3_i32_47 : i32 to vector<8x1xi32>
    %147 = arith.cmpi eq, %109, %146 : vector<8x1xi32>
    %148 = arith.select %147, %66, %145 : vector<8x1xi1>, vector<8x1xf32>
    %cst_48 = arith.constant 0.000000e+00 : f32
    %149 = vector.broadcast %cst_48 : f32 to vector<8x1xf32>
    %c0_i32_49 = arith.constant 0 : i32
    %150 = vector.broadcast %c0_i32_49 : i32 to vector<8x1xi32>
    %151 = arith.cmpi eq, %109, %150 : vector<8x1xi32>
    %152 = arith.select %151, %84, %149 : vector<8x1xi1>, vector<8x1xf32>
    %c1_i32_50 = arith.constant 1 : i32
    %153 = vector.broadcast %c1_i32_50 : i32 to vector<8x1xi32>
    %154 = arith.cmpi eq, %109, %153 : vector<8x1xi32>
    %155 = arith.select %154, %72, %152 : vector<8x1xi1>, vector<8x1xf32>
    %c2_i32_51 = arith.constant 2 : i32
    %156 = vector.broadcast %c2_i32_51 : i32 to vector<8x1xi32>
    %157 = arith.cmpi eq, %109, %156 : vector<8x1xi32>
    %158 = arith.select %157, %60, %155 : vector<8x1xi1>, vector<8x1xf32>
    %c3_i32_52 = arith.constant 3 : i32
    %159 = vector.broadcast %c3_i32_52 : i32 to vector<8x1xi32>
    %160 = arith.cmpi eq, %109, %159 : vector<8x1xi32>
    %161 = arith.select %160, %48, %158 : vector<8x1xi1>, vector<8x1xf32>
    %cst_53 = arith.constant 0.000000e+00 : f32
    %162 = vector.broadcast %cst_53 : f32 to vector<8x1xf32>
    %c0_i32_54 = arith.constant 0 : i32
    %163 = vector.broadcast %c0_i32_54 : i32 to vector<8x1xi32>
    %164 = arith.cmpi eq, %109, %163 : vector<8x1xi32>
    %165 = arith.select %164, %96, %162 : vector<8x1xi1>, vector<8x1xf32>
    %c1_i32_55 = arith.constant 1 : i32
    %166 = vector.broadcast %c1_i32_55 : i32 to vector<8x1xi32>
    %167 = arith.cmpi eq, %109, %166 : vector<8x1xi32>
    %168 = arith.select %167, %84, %165 : vector<8x1xi1>, vector<8x1xf32>
    %c2_i32_56 = arith.constant 2 : i32
    %169 = vector.broadcast %c2_i32_56 : i32 to vector<8x1xi32>
    %170 = arith.cmpi eq, %109, %169 : vector<8x1xi32>
    %171 = arith.select %170, %72, %168 : vector<8x1xi1>, vector<8x1xf32>
    %c3_i32_57 = arith.constant 3 : i32
    %172 = vector.broadcast %c3_i32_57 : i32 to vector<8x1xi32>
    %173 = arith.cmpi eq, %109, %172 : vector<8x1xi32>
    %174 = arith.select %173, %60, %171 : vector<8x1xi1>, vector<8x1xf32>
    %cst_58 = arith.constant 0.000000e+00 : f32
    %175 = vector.broadcast %cst_58 : f32 to vector<8x1xf32>
    %c0_i32_59 = arith.constant 0 : i32
    %176 = vector.broadcast %c0_i32_59 : i32 to vector<8x1xi32>
    %177 = arith.cmpi eq, %109, %176 : vector<8x1xi32>
    %178 = arith.select %177, %108, %175 : vector<8x1xi1>, vector<8x1xf32>
    %c1_i32_60 = arith.constant 1 : i32
    %179 = vector.broadcast %c1_i32_60 : i32 to vector<8x1xi32>
    %180 = arith.cmpi eq, %109, %179 : vector<8x1xi32>
    %181 = arith.select %180, %96, %178 : vector<8x1xi1>, vector<8x1xf32>
    %c2_i32_61 = arith.constant 2 : i32
    %182 = vector.broadcast %c2_i32_61 : i32 to vector<8x1xi32>
    %183 = arith.cmpi eq, %109, %182 : vector<8x1xi32>
    %184 = arith.select %183, %84, %181 : vector<8x1xi1>, vector<8x1xf32>
    %c3_i32_62 = arith.constant 3 : i32
    %185 = vector.broadcast %c3_i32_62 : i32 to vector<8x1xi32>
    %186 = arith.cmpi eq, %109, %185 : vector<8x1xi32>
    %187 = arith.select %186, %72, %184 : vector<8x1xi1>, vector<8x1xf32>
    %cst_63 = arith.constant 0.000000e+00 : f32
    %188 = vector.broadcast %cst_63 : f32 to vector<8x121xf32>
    %189 = tpu.concatenate %36, %122, %135, %148, %161, %174, %187, %188 in 1 : vector<8x1xf32>, vector<8x1xf32>, vector<8x1xf32>, vector<8x1xf32>, vector<8x1xf32>, vector<8x1xf32>, vector<8x1xf32>, vector<8x121xf32> -> vector<8x128xf32>
    %cst_64 = arith.constant 2.000000e+00 : f32
    %190 = vector.broadcast %cst_64 : f32 to vector<8x128xf32>
    %191 = arith.mulf %189, %190 : vector<8x128xf32>
    %c0_65 = arith.constant 0 : index
    %c0_66 = arith.constant 0 : index
    %192 = vector.load %arg8[%c0_65, %c0_66] : memref<8x128xf32, #tpu.memory_space<vmem>>, vector<8x128xf32>
    tpu.vector_store %arg8[%c0_65, %c0_66], %191 {strides = array<i32>} : memref<8x128xf32, #tpu.memory_space<vmem>>, vector<8x128xf32>,
    return
  }
  func.func @transform_0(%arg0: i32) -> (i32, i32, i32) {
    %c0_i32 = arith.constant 0 : i32
    %c0_i32_0 = arith.constant 0 : i32
    %c0_i32_1 = arith.constant 0 : i32
    return %c0_i32, %arg0, %c0_i32_0 : i32, i32, i32
  }
  func.func @transform_1(%arg0: i32) -> (i32, i32) {
    %c0_i32 = arith.constant 0 : i32
    %c0_i32_0 = arith.constant 0 : i32
    return %arg0, %c0_i32 : i32, i32
  }
  func.func @transform_2(%arg0: i32) -> (i32, i32) {
    %c0_i32 = arith.constant 0 : i32
    %c0_i32_0 = arith.constant 0 : i32
    %c0_i32_1 = arith.constant 0 : i32
    return %c0_i32, %c0_i32_0 : i32, i32
  }
  func.func @transform_3(%arg0: i32) -> (i32, i32) {
    %c0_i32 = arith.constant 0 : i32
    %c0_i32_0 = arith.constant 0 : i32
    %c0_i32_1 = arith.constant 0 : i32
    return %c0_i32, %c0_i32_0 : i32, i32
  }
  func.func @transform_4(%arg0: i32) -> (i32, i32) {
    %c0_i32 = arith.constant 0 : i32
    %c0_i32_0 = arith.constant 0 : i32
    %c0_i32_1 = arith.constant 0 : i32
    return %c0_i32, %c0_i32_0 : i32, i32
  }
  func.func @transform_5(%arg0: i32) -> (i32, i32) {
    %c0_i32 = arith.constant 0 : i32
    %c0_i32_0 = arith.constant 0 : i32
    %c0_i32_1 = arith.constant 0 : i32
    return %c0_i32, %c0_i32_0 : i32, i32
  }
  func.func @transform_6(%arg0: i32) -> (i32, i32, i32) {
    %c0_i32 = arith.constant 0 : i32
    %c0_i32_0 = arith.constant 0 : i32
    %c0_i32_1 = arith.constant 0 : i32
    return %c0_i32, %arg0, %c0_i32_0 : i32, i32, i32
  }
  func.func @transform_7(%arg0: i32) -> (i32, i32) {
    %c0_i32 = arith.constant 0 : i32
    %c0_i32_0 = arith.constant 0 : i32
    return %arg0, %c0_i32 : i32, i32
  }
}

</mosaic_0001>

<llo_original>
// kernel: tpu_custom_call.1
$region0: #{tpu_custom_call.1}
  #allocation0 [shape = 'u32[]', space=smem, size = 0x4, offset = 0x4, fixed_abs, tag = 'smem constant byte address 0x4 - core index']
  #allocation1 [shape = 'u32[144,128]{1,0:T(1,128)}', space=vmem, size = 0x12000, scoped, tag = 'internal scratch']
  %s0 = inlined_call_operand.vmem [shape: bf16[2,8,32], index: 0, kind: input, shape index: {}]
  %s1 = inlined_call_operand.vmem [shape: s32[8,1], index: 1, kind: input, shape index: {}]
  %s2 = inlined_call_operand.vmem [shape: bf16[32,64], index: 2, kind: input, shape index: {}]
  %s3 = inlined_call_operand.vmem [shape: f32[1,64], index: 3, kind: input, shape index: {}]
  %s4 = inlined_call_operand.vmem [shape: bf16[64,32], index: 4, kind: input, shape index: {}]
  %s5 = inlined_call_operand.vmem [shape: f32[1,32], index: 5, kind: input, shape index: {}]
  %s6 = inlined_call_operand.hbm [shape: f32[2,8,32], index: 6, kind: output, shape index: {0}]
  %s7 = inlined_call_operand.hbm [shape: f32[8,128], index: 7, kind: output, shape index: {1}]
  %8 = xla_tuple %s6, %s7
  %s9 = sld [smem:[#allocation0]]
  $region42: #{tpu_custom_call.1} parent=0
    _
  %s11 = ssub.s32 1, %s9
  %s12 = scalar_select 0, %s11, %s9
  $region1: #{tpu_custom_call.1} parent=0
    #allocation2 [shape = 'u8[8192]{0}', space=vmem, size = 0x2000, scoped, tag = 'output window, operand 0, single buffered']
    #allocation3 [shape = 's32[1]{0}', space=sflag, size = 0x4, scoped, tag = 'scoped memory for tpu_custom_call.1']
    #allocation4 [shape = 'u8[4096]{0}', space=vmem, size = 0x1000, scoped, tag = 'output window, operand 1, single buffered']
    #allocation5 [shape = 's32[1]{0}', space=sflag, size = 0x4, scoped, tag = 'scoped memory for tpu_custom_call.1']
    %13 = vsyncpa [#allocation3], 0
    %14 = vsyncpa [#allocation5], 0
    // Predicated region
    $region2: #{tpu_custom_call.1} parent=1 // pred_check
      _
    $region3: #{tpu_custom_call.1} parent=1 // pred_check_branch
      %16 = sbr.rel (0) target = $region5
    $region4: #{tpu_custom_call.1} parent=1 // pred_region
      _
    $region5: #{tpu_custom_call.1} parent=1 // pred_fallthru
      _
    // Predicated region
    $region6: #{tpu_custom_call.1} parent=1 // pred_check
      _
    $region7: #{tpu_custom_call.1} parent=1 // pred_check_branch
      %18 = sbr.rel (0) target = $region9
    $region8: #{tpu_custom_call.1} parent=1 // pred_region
      _
    $region9: #{tpu_custom_call.1} parent=1 // pred_fallthru
      _
    // Predicated region
    $region10: #{tpu_custom_call.1} parent=1 // pred_check
      _
    $region11: #{tpu_custom_call.1} parent=1 // pred_check_branch
      %20 = sbr.rel (0) target = $region13
    $region12: #{tpu_custom_call.1} parent=1 // pred_region
      _
    $region13: #{tpu_custom_call.1} parent=1 // pred_fallthru
      _
    // Predicated region
    $region14: #{tpu_custom_call.1} parent=1 // pred_check
      _
    $region15: #{tpu_custom_call.1} parent=1 // pred_check_branch
      %22 = sbr.rel (0) target = $region17
    $region16: #{tpu_custom_call.1} parent=1 // pred_region
      _
    $region17: #{tpu_custom_call.1} parent=1 // pred_fallthru
      _
    // Predicated region
    $region18: #{tpu_custom_call.1} parent=1 // pred_check
      _
    $region19: #{tpu_custom_call.1} parent=1 // pred_check_branch
      %24 = sbr.rel (0) target = $region21
    $region20: #{tpu_custom_call.1} parent=1 // pred_region
      _
    $region21: #{tpu_custom_call.1} parent=1 // pred_fallthru
      _
    // Predicated region
    $region22: #{tpu_custom_call.1} parent=1 // pred_check
      _
    $region23: #{tpu_custom_call.1} parent=1 // pred_check_branch
      %26 = sbr.rel (0) target = $region25
    $region24: #{tpu_custom_call.1} parent=1 // pred_region
      _
    $region25: #{tpu_custom_call.1} parent=1 // pred_fallthru
      _
    %v28 = vld [vmem:[%s0] sm:$0xf]
    %s29 = scalar_lea.vmem %s0, 4
    %v30 = vld [vmem:[%s29] sm:$0xf]
    %v32 = vunpack.c.l.b16 %v30
    %v33 = vpack.c.b16 %v32, %v32
    %vm34 = vcmask 1043456
    %v37 = vsel %vm34, %v28, %v33
    %v38 = vld [vmem:[%s2] sm:$0xf]
    %v39 = vld [vmem:[%s2 + $0x4] sm:$0xf]
    %v40 = vld [vmem:[%s2 + $0x8] sm:$0xf]
    %v41 = vld [vmem:[%s2 + $0xc] sm:$0xf]
    %v42 = vld [vmem:[%s3] sm:$0x1]
    %v44 = vlaneseq
    %v45 = vshrl.u32 %v44, 7
    %v46 = vsub.s32 0, %v45
    %v47 = vrot.slane %v42, %v46
    %v53 = vunpack.c.l.b16 %v38
    %v54 = vunpack.c.l.b16 %v39
    %v55 = vunpack.c.l.b16 %v40
    %v56 = vunpack.c.l.b16 %v41
    %v57 = vpack.c.b16 %v54, %v53
    %v58 = vpack.c.b16 %v56, %v55
    %vm61 = vcmask 261120
    %v62 = vsel %vm61, %v37, 0
    %64 = vmatprep.subr.bf16.mxu0 0
    %65 = vmatpush1.bf16.msra.mxu0 %v57
    %66 = vmatprep.subr.bf16.mxu0 0
    %67 = vmatpush1.bf16.msra.mxu0 %v58
    %68 = vmatprep.subr.bf16.mxu0 0
    %69 = vmatpush1.bf16.msra.mxu0 0
    %70 = vmatprep.subr.bf16.mxu0 0
    %71 = vmatpush1.bf16.msra.mxu0 0
    %72 = vmatprep.subr.bf16.mxu0 0
    %73 = vmatpush1.bf16.msra.mxu0 0
    %74 = vmatprep.subr.bf16.mxu0 0
    %75 = vmatpush1.bf16.msra.mxu0 0
    %76 = vmatprep.subr.bf16.mxu0 0
    %77 = vmatpush1.bf16.msra.mxu0 0
    %78 = vmatprep.subr.bf16.mxu0 0
    %79 = vmatpush1.bf16.msra.mxu0 0
    %80 = vmatprep.subr.bf16.mxu0 0
    %81 = vmatpush1.bf16.msra.mxu0 0
    %82 = vmatprep.subr.bf16.mxu0 0
    %83 = vmatpush1.bf16.msra.mxu0 0
    %84 = vmatprep.subr.bf16.mxu0 0
    %85 = vmatpush1.bf16.msra.mxu0 0
    %86 = vmatprep.subr.bf16.mxu0 0
    %87 = vmatpush1.bf16.msra.mxu0 0
    %88 = vmatprep.subr.bf16.mxu0 0
    %89 = vmatpush1.bf16.msra.mxu0 0
    %90 = vmatprep.subr.bf16.mxu0 0
    %91 = vmatpush1.bf16.msra.mxu0 0
    %92 = vmatprep.subr.bf16.mxu0 0
    %93 = vmatpush1.bf16.msra.mxu0 0
    %94 = vmatprep.subr.bf16.mxu0 0
    %95 = vmatpush1.bf16.msra.mxu0 0
    %96 = vmatprep.mubr.bf16.mxu0 0
    %97 = vmatmul.mubr.bf16.gmra.mrb[0].mxu0 %v62
    %v98 = vpop.f32.mrb[0].mxu0
    %v99 = vadd.f32 %v47, %v98
    %v100 = vpop.f32.mrb[0].mxu0
    %v101 = vpop.f32.mrb[0].mxu0
    %v102 = vadd.f32 %v47, %v101
    %v103 = vpop.f32.mrb[0].mxu0
    %104 = vdwg.mxu0
    %v105 = vmax.f32 %v99, 0.0
    %v106 = vmax.f32 %v102, 0.0
    %v107 = vpack.c.bf16 %v106, %v105
    %v108 = vld [vmem:[%s4] sm:$0xf]
    %v109 = vld [vmem:[%s4 + $0x4] sm:$0xf]
    %v110 = vld [vmem:[%s4 + $0x8] sm:$0xf]
    %v111 = vld [vmem:[%s4 + $0xc] sm:$0xf]
    %v112 = vld [vmem:[%s4 + $0x10] sm:$0xf]
    %v113 = vld [vmem:[%s4 + $0x14] sm:$0xf]
    %v114 = vld [vmem:[%s4 + $0x18] sm:$0xf]
    %v115 = vld [vmem:[%s4 + $0x1c] sm:$0xf]
    %v116 = vld [vmem:[%s5] sm:$0x1]
    %v118 = vlaneseq
    %v119 = vshrl.u32 %v118, 7
    %v120 = vsub.s32 0, %v119
    %v121 = vrot.slane %v116, %v120
    %v131 = vunpack.c.l.b16 %v108
    %v132 = vunpack.c.l.b16 %v109
    %v133 = vunpack.c.l.b16 %v110
    %v134 = vunpack.c.l.b16 %v111
    %v135 = vunpack.c.l.b16 %v112
    %v136 = vunpack.c.l.b16 %v113
    %v137 = vunpack.c.l.b16 %v114
    %v138 = vunpack.c.l.b16 %v115
    %v139 = vpack.c.b16 %v132, %v131
    %v140 = vpack.c.b16 %v134, %v133
    %v141 = vpack.c.b16 %v136, %v135
    %v142 = vpack.c.b16 %v138, %v137
    %vm147 = vcmask 523264
    %v149 = vsel %vm147, %v107, 0
    %151 = vmatprep.subr.bf16.mxu0 0
    %152 = vmatpush1.bf16.msra.mxu0 %v139
    %153 = vmatprep.subr.bf16.mxu0 0
    %154 = vmatpush1.bf16.msra.mxu0 %v140
    %155 = vmatprep.subr.bf16.mxu0 0
    %156 = vmatpush1.bf16.msra.mxu0 %v141
    %157 = vmatprep.subr.bf16.mxu0 0
    %158 = vmatpush1.bf16.msra.mxu0 %v142
    %159 = vmatprep.subr.bf16.mxu0 0
    %160 = vmatpush1.bf16.msra.mxu0 0
    %161 = vmatprep.subr.bf16.mxu0 0
    %162 = vmatpush1.bf16.msra.mxu0 0
    %163 = vmatprep.subr.bf16.mxu0 0
    %164 = vmatpush1.bf16.msra.mxu0 0
    %165 = vmatprep.subr.bf16.mxu0 0
    %166 = vmatpush1.bf16.msra.mxu0 0
    %167 = vmatprep.subr.bf16.mxu0 0
    %168 = vmatpush1.bf16.msra.mxu0 0
    %169 = vmatprep.subr.bf16.mxu0 0
    %170 = vmatpush1.bf16.msra.mxu0 0
    %171 = vmatprep.subr.bf16.mxu0 0
    %172 = vmatpush1.bf16.msra.mxu0 0
    %173 = vmatprep.subr.bf16.mxu0 0
    %174 = vmatpush1.bf16.msra.mxu0 0
    %175 = vmatprep.subr.bf16.mxu0 0
    %176 = vmatpush1.bf16.msra.mxu0 0
    %177 = vmatprep.subr.bf16.mxu0 0
    %178 = vmatpush1.bf16.msra.mxu0 0
    %179 = vmatprep.subr.bf16.mxu0 0
    %180 = vmatpush1.bf16.msra.mxu0 0
    %181 = vmatprep.subr.bf16.mxu0 0
    %182 = vmatpush1.bf16.msra.mxu0 0
    %183 = vmatprep.mubr.bf16.mxu0 0
    %184 = vmatmul.mubr.bf16.gmra.mrb[0].mxu0 %v149
    %v185 = vpop.f32.mrb[0].mxu0
    %v186 = vadd.f32 %v121, %v185
    %v187 = vpop.f32.mrb[0].mxu0
    %v188 = vpop.f32.mrb[0].mxu0
    %v189 = vadd.f32 %v121, %v188
    %v190 = vpop.f32.mrb[0].mxu0
    %191 = vdwg.mxu0
    %v192 = vmul.f32 %v186, %v186
    %v193 = vmul.f32 %v189, %v189
    %v194 = vsel %vm61, %v192, 0.0
    %195 = vadd.xlane.f32.xlu0 %v194
    %v196 = vpop.xlane.xlu0 %195
    %v197 = vsel %vm61, %v193, 0.0
    %198 = vadd.xlane.f32.xlu0 %v197
    %v199 = vpop.xlane.xlu0 %198
    %v200 = vmax.f32 %v196, 1e-24
    %v201 = vmax.f32 %v199, 1e-24
    %v202 = vrsqrt.pop %v200
    %v203 = vrsqrt.pop %v201
    %v204 = vmul.f32 %v186, %v202
    %v205 = vmul.f32 %v189, %v203
    %206 = vst.msk [vmem:[#allocation2] sm:$0xff] %vm61, %v204
    %s207 = scalar_lea.vmem [#allocation2], 8
    %208 = vst.msk [vmem:[%s207] sm:$0xff] %vm61, %v205
    %v209 = vmul.f32 %v204, %v205
    %v210 = vsel %vm61, %v209, 0.0
    %211 = vadd.xlane.f32.xlu0 %v210
    %v212 = vpop.xlane.xlu0 %211
    %v214 = vrot.slane %v204, 5
    %vm216 = vcmask 1042432
    %v217 = vsel %vm216, %v214, %v214
    %v218 = vmul.f32 %v204, %v217
    %v219 = vsel %vm61, %v218, 0.0
    %220 = vadd.xlane.f32.xlu0 %v219
    %v221 = vpop.xlane.xlu0 %220
    %v223 = vrot.slane %v205, 5
    %v225 = vsel %vm216, %v223, %v223
    %v226 = vmul.f32 %v204, %v225
    %v227 = vsel %vm61, %v226, 0.0
    %228 = vadd.xlane.f32.xlu0 %v227
    %v229 = vpop.xlane.xlu0 %228
    %v230 = vrot.slane %v204, 6
    %vm232 = vcmask 1041408
    %v233 = vsel %vm232, %v230, %v230
    %v234 = vmul.f32 %v204, %v233
    %v235 = vsel %vm61, %v234, 0.0
    %236 = vadd.xlane.f32.xlu0 %v235
    %v237 = vpop.xlane.xlu0 %236
    %v238 = vrot.slane %v205, 6
    %v240 = vsel %vm232, %v238, %v238
    %v241 = vmul.f32 %v204, %v240
    %v242 = vsel %vm61, %v241, 0.0
    %243 = vadd.xlane.f32.xlu0 %v242
    %v244 = vpop.xlane.xlu0 %243
    %v245 = vrot.slane %v204, 7
    %vm247 = vcmask 1040384
    %v248 = vsel %vm247, %v245, %v245
    %v249 = vmul.f32 %v204, %v248
    %v250 = vsel %vm61, %v249, 0.0
    %251 = vadd.xlane.f32.xlu0 %v250
    %v252 = vpop.xlane.xlu0 %251
    %v253 = vrot.slane %v205, 7
    %v255 = vsel %vm247, %v253, %v253
    %v256 = vmul.f32 %v204, %v255
    %v257 = vsel %vm61, %v256, 0.0
    %258 = vadd.xlane.f32.xlu0 %v257
    %v259 = vpop.xlane.xlu0 %258
    %v260 = vrot.slane %v204, 1
    %vm262 = vcmask 1046528
    %v263 = vsel %vm262, %v260, %v260
    %v264 = vmul.f32 %v204, %v263
    %v265 = vsel %vm61, %v264, 0.0
    %266 = vadd.xlane.f32.xlu0 %v265
    %v267 = vpop.xlane.xlu0 %266
    %v268 = vrot.slane %v205, 1
    %v270 = vsel %vm262, %v268, %v268
    %v271 = vmul.f32 %v204, %v270
    %v272 = vsel %vm61, %v271, 0.0
    %273 = vadd.xlane.f32.xlu0 %v272
    %v274 = vpop.xlane.xlu0 %273
    %v275 = vrot.slane %v204, 2
    %vm277 = vcmask 1045504
    %v278 = vsel %vm277, %v275, %v275
    %v279 = vmul.f32 %v204, %v278
    %v280 = vsel %vm61, %v279, 0.0
    %281 = vadd.xlane.f32.xlu0 %v280
    %v282 = vpop.xlane.xlu0 %281
    %v283 = vrot.slane %v205, 2
    %v285 = vsel %vm277, %v283, %v283
    %v286 = vmul.f32 %v204, %v285
    %v287 = vsel %vm61, %v286, 0.0
    %288 = vadd.xlane.f32.xlu0 %v287
    %v289 = vpop.xlane.xlu0 %288
    %v290 = vrot.slane %v204, 3
    %vm292 = vcmask 1044480
    %v293 = vsel %vm292, %v290, %v290
    %v294 = vmul.f32 %v204, %v293
    %v295 = vsel %vm61, %v294, 0.0
    %296 = vadd.xlane.f32.xlu0 %v295
    %v297 = vpop.xlane.xlu0 %296
    %v298 = vrot.slane %v205, 3
    %v300 = vsel %vm292, %v298, %v298
    %v301 = vmul.f32 %v204, %v300
    %v302 = vsel %vm61, %v301, 0.0
    %303 = vadd.xlane.f32.xlu0 %v302
    %v304 = vpop.xlane.xlu0 %303
    %v305 = vld [vmem:[%s1] sm:$0xff]
    %vm306 = vcmp.eq.s32.totalorder %v305, 0
    %v307 = vsel %vm306, %v267, 0.0
    %vm308 = vcmp.eq.s32.totalorder %v305, 1
    %v309 = vsel %vm308, %v252, %v307
    %vm310 = vcmp.eq.s32.totalorder %v305, 2
    %v311 = vsel %vm310, %v237, %v309
    %vm312 = vcmp.eq.s32.totalorder %v305, 3
    %v313 = vsel %vm312, %v221, %v311
    %v314 = vsel %vm306, %v282, 0.0
    %v315 = vsel %vm308, %v267, %v314
    %v316 = vsel %vm310, %v252, %v315
    %v317 = vsel %vm312, %v237, %v316
    %v318 = vsel %vm306, %v297, 0.0
    %v319 = vsel %vm308, %v282, %v318
    %v320 = vsel %vm310, %v267, %v319
    %v321 = vsel %vm312, %v252, %v320
    %v322 = vsel %vm306, %v274, 0.0
    %v323 = vsel %vm308, %v259, %v322
    %v324 = vsel %vm310, %v244, %v323
    %v325 = vsel %vm312, %v229, %v324
    %v326 = vsel %vm306, %v289, 0.0
    %v327 = vsel %vm308, %v274, %v326
    %v328 = vsel %vm310, %v259, %v327
    %v329 = vsel %vm312, %v244, %v328
    %v330 = vsel %vm306, %v304, 0.0
    %v331 = vsel %vm308, %v289, %v330
    %v332 = vsel %vm310, %v274, %v331
    %v333 = vsel %vm312, %v259, %v332
    %335 = vrot.lane.b32.xlu0 %v313, 1
    %v336 = vpop.permute.xlu0 %335
    %339 = vrot.lane.b32.xlu0 %v317, 2
    %v340 = vpop.permute.xlu0 %339
    %343 = vrot.lane.b32.xlu0 %v321, 3
    %v344 = vpop.permute.xlu0 %343
    %347 = vrot.lane.b32.xlu0 %v325, 4
    %v348 = vpop.permute.xlu0 %347
    %351 = vrot.lane.b32.xlu0 %v329, 5
    %v352 = vpop.permute.xlu0 %351
    %355 = vrot.lane.b32.xlu0 %v333, 6
    %v356 = vpop.permute.xlu0 %355
    %vm358 = vcmask 7168
    %v359 = vsel %vm358, %v212, %v336
    %vm360 = vcmask 15360
    %v361 = vsel %vm360, %v359, %v340
    %vm362 = vcmask 23552
    %v363 = vsel %vm362, %v361, %v344
    %vm364 = vcmask 31744
    %v365 = vsel %vm364, %v363, %v348
    %vm366 = vcmask 39936
    %v367 = vsel %vm366, %v365, %v352
    %vm368 = vcmask 48128
    %v369 = vsel %vm368, %v367, %v356
    %vm370 = vcmask 56320
    %v371 = vsel %vm370, %v369, 0.0
    %v372 = vmul.f32 %v371, 2.0
    %373 = vst [vmem:[#allocation4] sm:$0xff] %v372
    // Predicated region
    $region26: #{tpu_custom_call.1} parent=1 // pred_check
      _
    $region27: #{tpu_custom_call.1} parent=1 // pred_check_branch
      %375 = sbr.rel (0) target = $region29
    $region28: #{tpu_custom_call.1} parent=1 // pred_region
      %s377 = ssub.s32 256, 256
      %378 = vsyncadd [#allocation3], %s377
      %s379 = sshll.u32 [#allocation2], 4
      %s380 = int_to_ptr.vmem [resolvable:$true] %s379
      %385 = dma.vmem_to_hbm [thread:$0]  %s380, 256, %s6, [#allocation3], 128, 128, 8
    $region29: #{tpu_custom_call.1} parent=1 // pred_fallthru
      _
    // Predicated region
    $region30: #{tpu_custom_call.1} parent=1 // pred_check
      _
    $region31: #{tpu_custom_call.1} parent=1 // pred_check_branch
      %387 = sbr.rel (0) target = $region33
    $region32: #{tpu_custom_call.1} parent=1 // pred_region
      %s389 = ssub.s32 128, 128
      %390 = vsyncadd [#allocation5], %s389
      %s392 = sshll.u32 [#allocation4], 4
      %s393 = int_to_ptr.vmem [resolvable:$true] %s392
      %395 = dma.vmem_to_hbm [thread:$0]  %s393, 128, %s7, [#allocation5]
    $region33: #{tpu_custom_call.1} parent=1 // pred_fallthru
      _
    // Predicated region
    $region34: #{tpu_custom_call.1} parent=1 // pred_check
      _
    $region35: #{tpu_custom_call.1} parent=1 // pred_check_branch
      %397 = sbr.rel (0) target = $region37
    $region36: #{tpu_custom_call.1} parent=1 // pred_region
      %398 = dma.done [#allocation3], 256
    $region37: #{tpu_custom_call.1} parent=1 // pred_fallthru
      _
    // Predicated region
    $region38: #{tpu_custom_call.1} parent=1 // pred_check
      _
    $region39: #{tpu_custom_call.1} parent=1 // pred_check_branch
      %400 = sbr.rel (0) target = $region41
    $region40: #{tpu_custom_call.1} parent=1 // pred_region
      %401 = dma.done [#allocation5], 128
    $region41: #{tpu_custom_call.1} parent=1 // pred_fallthru
      _
    %402 = vsyncpa [#allocation3], 1
    %403 = vsyncpa [#allocation5], 1

</llo_original>
